<compile_context>
chip_gen: v7x
topology: tpu7x:2x2x1
jax: 0.10.0
libtpu: 0.0.40
codegen_flags: <defaults>
</compile_context>

<pallas_src>
import functools
import math

import jax
import jax.numpy as jnp
from jax.experimental import pallas as pl
from jax.experimental.pallas import tpu as pltpu


# ---------------------------------------------------------------------------
# sizing helpers (generation aware)
# ---------------------------------------------------------------------------

def _vmem_params():
    """(vmem_limit_bytes, per-block byte budget) derived from the chip's VMEM."""
    try:
        cap = int(getattr(pltpu.get_tpu_info(), "vmem_capacity_bytes",
                          64 * 1024 * 1024))
    except Exception:
        cap = 64 * 1024 * 1024                     # conservative (v7x per-core)
    limit = max(16 * 1024 * 1024, min(cap // 2, 64 * 1024 * 1024))
    # 2-4 MiB blocks hit the measured HBM-roofline knee on v5e/v6e/v7x while
    # provably fitting v7x (in+out double-buffered ~= 4x one block << limit).
    budget = max(256 * 1024, min(4 * 1024 * 1024, limit // 8))
    return limit, budget


def _sublane_align(dtype):
    """Native sublane tiling: 8 for 4-byte, 16 for 2-byte, 32 for 1-byte dtypes."""
    return max(8, 32 // jnp.dtype(dtype).itemsize)


def _round_up(x, m):
    return ((x + m - 1) // m) * m


def _pick_tile(extent, unit_bytes, align, budget, min_steps=1):
    """Largest multiple of `align` (or the full extent) whose block fits `budget`.

    Returns None when even a single `align`-sized block exceeds the budget, so the
    caller can fall back gracefully instead of silently exceeding VMEM.  When the
    extent allows, the tile is capped so the grid has >= `min_steps` blocks.
    """
    max_fit = (budget // max(unit_bytes, 1)) // align * align
    if max_fit < align:
        return None
    tile = min(max_fit, extent)
    if min_steps > 1 and extent > min_steps * align:
        cap = _round_up(-(-extent // min_steps), align)     # ceil-div, round up
        tile = min(tile, cap)
    if tile >= extent:
        return extent
    return max(align, (tile // align) * align)


def _pick_pack_factor(rows, c):
    """Minimal rows-per-packed-row k such that k*C is a multiple of 128.

    MXU work in the packed kernel scales linearly with k, so the smallest lane-
    dense k is always preferred.  Returns None when packing is not worthwhile
    (C already a multiple of 128, lcm(C,128) too wide, or too few rows)."""
    if c % 128 == 0:
        return None
    k0 = 128 // math.gcd(c, 128)
    if k0 * c > 512 or rows < k0:
        return None
    return k0


# ---------------------------------------------------------------------------
# pure-JAX references (also used as graceful fallbacks for pathological sizes)
# ---------------------------------------------------------------------------

def _ref_channels_first(x, weight, bias, eps):
    xf = x.astype(jnp.float32)
    u = jnp.mean(xf, axis=1, keepdims=True)
    s = jnp.mean((xf - u) ** 2, axis=1, keepdims=True)
    xn = (xf - u) / jnp.sqrt(s + eps)
    return weight.astype(jnp.float32)[None, :, None, None] * xn \
        + bias.astype(jnp.float32)[None, :, None, None]


def _ref_channels_last(x, weight, bias, eps):
    xf = x.astype(jnp.float32)
    u = jnp.mean(xf, axis=-1, keepdims=True)
    s = jnp.mean((xf - u) ** 2, axis=-1, keepdims=True)
    xn = (xf - u) / jnp.sqrt(s + eps)
    return xn * weight.astype(jnp.float32) + bias.astype(jnp.float32)


# ---------------------------------------------------------------------------
# kernels
# ---------------------------------------------------------------------------

def _ln_channels_first_kernel(x_ref, w_ref, b_ref, o_ref, *, eps, inv_c):
    # x_ref: (1, C, T) -- C on sublanes, spatial tile T on lanes (transpose-free).
    x = x_ref[0].astype(jnp.float32)                          # (C, T)
    mean = jnp.sum(x, axis=0, keepdims=True) * inv_c          # (1, T)
    ex2 = jnp.sum(x * x, axis=0, keepdims=True) * inv_c
    var = jnp.maximum(ex2 - mean * mean, 0.0)
    inv = jax.lax.rsqrt(var + eps)
    w = w_ref[0]                                              # (C, 1) fp32
    b = b_ref[0]
    o_ref[0] = (((x - mean) * inv) * w + b).astype(o_ref.dtype)


def _ln_rows_kernel(x_ref, w_ref, b_ref, o_ref, *, eps, inv_c):
    # x_ref: (T, C) -- normalize over the last (lane) axis.
    x = x_ref[...].astype(jnp.float32)
    mean = jnp.sum(x, axis=-1, keepdims=True) * inv_c
    ex2 = jnp.sum(x * x, axis=-1, keepdims=True) * inv_c
    var = jnp.maximum(ex2 - mean * mean, 0.0)
    inv = jax.lax.rsqrt(var + eps)
    w = w_ref[...]                                            # (1, C) fp32
    b = b_ref[...]
    o_ref[...] = (((x - mean) * inv) * w + b).astype(o_ref.dtype)


def _ln_packed_kernel(x_ref, w_ref, b_ref, o_ref, *, eps, c, k, bf16_dots):
    # x_ref: (T, k*C) -- k logical rows packed into one lane-dense block row.
    kc = k * c
    inv_c = 1.0 / c
    x = x_ref[...]
    xf = x.astype(jnp.float32)

    # 0/1 segment matrices built in-register (no extra DMA'd inputs / VMEM bufs).
    lane_s = jax.lax.broadcasted_iota(jnp.int32, (kc, k), 0)
    grp_s = jax.lax.broadcasted_iota(jnp.int32, (kc, k), 1) * c
    seg = (lane_s >= grp_s) & (lane_s < grp_s + c)            # (kc, k)
    lane_t = jax.lax.broadcasted_iota(jnp.int32, (k, kc), 1)
    grp_t = jax.lax.broadcasted_iota(jnp.int32, (k, kc), 0) * c
    seg_t = (lane_t >= grp_t) & (lane_t < grp_t + c)          # (k, kc)

    if bf16_dots:
        # bf16 inputs: segment matrices are exact in bf16 and the MXU accumulates
        # in fp32, so single-pass (DEFAULT precision) dots are enough.
        s = jnp.where(seg, 1.0, 0.0).astype(jnp.bfloat16)
        st = jnp.where(seg_t, 1.0, 0.0).astype(jnp.bfloat16)
        xb = x.astype(jnp.bfloat16)
        sum_x = jnp.dot(xb, s, preferred_element_type=jnp.float32)
        sum_x2 = jnp.dot(xb * xb, s, preferred_element_type=jnp.float32)
        mean = sum_x * inv_c
        var = jnp.maximum(sum_x2 * inv_c - mean * mean, 0.0)
        inv = jax.lax.rsqrt(var + eps)
        mean_b = jnp.dot(mean.astype(jnp.bfloat16), st,
                         preferred_element_type=jnp.float32)
        inv_b = jnp.dot(inv.astype(jnp.bfloat16), st,
                        preferred_element_type=jnp.float32)
    else:
        # fp32 inputs: HIGHEST keeps the segmented sums / broadcasts bit-accurate.
        # With the minimal pack factor k the arithmetic intensity stays below the
        # MXU/HBM crossover on all generations.
        # TODO(synk): switch the two broadcast-back dots to an XLU lane-repeat if
        # jnp.repeat along the lane axis gains a reliable Mosaic lowering; the dot
        # form is kept because it compiles everywhere and is exact.
        hi = jax.lax.Precision.HIGHEST
        s = jnp.where(seg, 1.0, 0.0).astype(jnp.float32)
        st = jnp.where(seg_t, 1.0, 0.0).astype(jnp.float32)
        sum_x = jnp.dot(xf, s, preferred_element_type=jnp.float32, precision=hi)
        sum_x2 = jnp.dot(xf * xf, s, preferred_element_type=jnp.float32,
                         precision=hi)
        mean = sum_x * inv_c
        var = jnp.maximum(sum_x2 * inv_c - mean * mean, 0.0)
        inv = jax.lax.rsqrt(var + eps)
        mean_b = jnp.dot(mean, st, preferred_element_type=jnp.float32, precision=hi)
        inv_b = jnp.dot(inv, st, preferred_element_type=jnp.float32, precision=hi)

    w = w_ref[...]                                            # (1, k*C) fp32
    b = b_ref[...]
    o_ref[...] = (((xf - mean_b) * inv_b) * w + b).astype(o_ref.dtype)


# ---------------------------------------------------------------------------
# pallas_call wrappers
# ---------------------------------------------------------------------------

def _layernorm_channels_first(x, weight, bias, eps):
    """Transpose-free LayerNorm over the channel axis of an NCHW tensor."""
    n, c, h, w = x.shape
    hw = h * w
    itemsize = jnp.dtype(x.dtype).itemsize
    limit, budget = _vmem_params()
    c_pad = _round_up(c, _sublane_align(x.dtype))             # VMEM sublane pad
    tile_hw = _pick_tile(hw, c_pad * itemsize, 128, budget, min_steps=8)
    if tile_hw is None:
        # Pathologically large C: graceful slow path instead of over-budget blocks.
        return _ref_channels_first(x, weight, bias, eps).astype(x.dtype)
    x3 = x.reshape(n, c, hw)                                  # free reshape
    w3 = weight.astype(jnp.float32).reshape(1, c, 1)
    b3 = bias.astype(jnp.float32).reshape(1, c, 1)
    grid = (n, pl.cdiv(hw, tile_hw))
    out = pl.pallas_call(
        functools.partial(_ln_channels_first_kernel, eps=eps, inv_c=1.0 / c),
        out_shape=jax.ShapeDtypeStruct((n, c, hw), x.dtype),
        grid=grid,
        in_specs=[
            pl.BlockSpec((1, c, tile_hw), lambda i, j: (i, 0, j)),
            pl.BlockSpec((1, c, 1), lambda i, j: (0, 0, 0)),
            pl.BlockSpec((1, c, 1), lambda i, j: (0, 0, 0)),
        ],
        out_specs=pl.BlockSpec((1, c, tile_hw), lambda i, j: (i, 0, j)),
        compiler_params=pltpu.CompilerParams(
            dimension_semantics=("parallel", "parallel"),
            vmem_limit_bytes=limit,
        ),
    )(x3, w3, b3)
    return out.reshape(n, c, h, w)


def _layernorm_rows(x2d, weight, bias, eps):
    """LayerNorm over the last axis of a (rows, C) array (C reasonably wide)."""
    rows, c = x2d.shape
    itemsize = jnp.dtype(x2d.dtype).itemsize
    limit, budget = _vmem_params()
    align = _sublane_align(x2d.dtype)
    unit = _round_up(c, 128) * itemsize                       # lane padding
    tile_rows = _pick_tile(rows, unit, align, budget, min_steps=8)
    if tile_rows is None:
        return _ref_channels_last(x2d, weight, bias, eps).astype(x2d.dtype)
    w2 = weight.astype(jnp.float32).reshape(1, c)
    b2 = bias.astype(jnp.float32).reshape(1, c)
    grid = (pl.cdiv(rows, tile_rows),)
    return pl.pallas_call(
        functools.partial(_ln_rows_kernel, eps=eps, inv_c=1.0 / c),
        out_shape=jax.ShapeDtypeStruct((rows, c), x2d.dtype),
        grid=grid,
        in_specs=[
            pl.BlockSpec((tile_rows, c), lambda i: (i, 0)),
            pl.BlockSpec((1, c), lambda i: (0, 0)),
            pl.BlockSpec((1, c), lambda i: (0, 0)),
        ],
        out_specs=pl.BlockSpec((tile_rows, c), lambda i: (i, 0)),
        compiler_params=pltpu.CompilerParams(
            dimension_semantics=("parallel",),
            vmem_limit_bytes=limit,
        ),
    )(x2d, w2, b2)


def _layernorm_rows_packed(x2d, weight, bias, eps, k):
    """Lane-dense LayerNorm for small C: pack k logical rows per block row."""
    rows, c = x2d.shape
    rp, kc = rows // k, k * c
    xp = x2d.reshape(rp, kc)                                  # free (contiguous)
    itemsize = jnp.dtype(x2d.dtype).itemsize
    limit, budget = _vmem_params()
    align = _sublane_align(x2d.dtype)
    tile_r = _pick_tile(rp, kc * itemsize, align, budget, min_steps=8)
    if tile_r is None:
        return _ref_channels_last(x2d, weight, bias, eps).astype(x2d.dtype)
    w_t = jnp.tile(weight.astype(jnp.float32), k).reshape(1, kc)
    b_t = jnp.tile(bias.astype(jnp.float32), k).reshape(1, kc)
    bf16_dots = x2d.dtype == jnp.bfloat16
    grid = (pl.cdiv(rp, tile_r),)
    out = pl.pallas_call(
        functools.partial(_ln_packed_kernel, eps=eps, c=c, k=k,
                          bf16_dots=bf16_dots),
        out_shape=jax.ShapeDtypeStruct((rp, kc), x2d.dtype),
        grid=grid,
        in_specs=[
            pl.BlockSpec((tile_r, kc), lambda i: (i, 0)),
            pl.BlockSpec((1, kc), lambda i: (0, 0)),
            pl.BlockSpec((1, kc), lambda i: (0, 0)),
        ],
        out_specs=pl.BlockSpec((tile_r, kc), lambda i: (i, 0)),
        compiler_params=pltpu.CompilerParams(
            dimension_semantics=("parallel",),
            vmem_limit_bytes=limit,
        ),
    )(xp, w_t, b_t)
    return out.reshape(rows, c)


# ---------------------------------------------------------------------------
# module wrapper
# ---------------------------------------------------------------------------

class LayerNormPallas:
    """JAX/Pallas equivalent of the PyTorch LayerNorm module (fvmamba.py)."""

    def __init__(self, normalized_shape, eps=1e-6, data_format="channels_last"):
        if data_format not in ("channels_last", "channels_first"):
            raise NotImplementedError
        self.eps = float(eps)
        self.data_format = data_format
        self.normalized_shape = (normalized_shape,)
        # Matches nn.Parameter(torch.ones/zeros).
        self.weight = jnp.ones((normalized_shape,), dtype=jnp.float32)
        self.bias = jnp.zeros((normalized_shape,), dtype=jnp.float32)

    def __call__(self, x):
        c = self.normalized_shape[0]
        if self.data_format == "channels_last":
            assert x.shape[-1] == c
            lead = x.shape[:-1]
            rows = 1
            for d in lead:
                rows *= int(d)
            x2d = x.reshape(rows, c)
            k = _pick_pack_factor(rows, c)
            if k is None:
                y2d = _layernorm_rows(x2d, self.weight, self.bias, self.eps)
            else:
                main = (rows // k) * k
                if main == rows:
                    y2d = _layernorm_rows_packed(x2d, self.weight, self.bias,
                                                 self.eps, k)
                else:
                    # Divisible prefix stays lane-dense; only the <k row tail
                    # uses the plain (masked) kernel.
                    # TODO(synk): fold the tail into a single ragged pallas_call
                    # to avoid the slice + concatenate copy of the prefix.
                    y_main = _layernorm_rows_packed(x2d[:main], self.weight,
                                                    self.bias, self.eps, k)
                    y_tail = _layernorm_rows(x2d[main:], self.weight,
                                             self.bias, self.eps)
                    y2d = jnp.concatenate([y_main, y_tail], axis=0)
            return y2d.reshape(*lead, c)
        else:
            # channels_first: NCHW, normalize over the channel axis (dim 1).
            n, cc, h, w = x.shape
            assert cc == c
            return _layernorm_channels_first(x, self.weight, self.bias, self.eps)


# ---------------------------------------------------------------------------
# self-test
# ---------------------------------------------------------------------------

if __name__ == "__main__":
    key = jax.random.PRNGKey(0)
    k1, k2, k3, k4, k5 = jax.random.split(key, 5)

    C = 4
    w_small = jnp.arange(1.0, C + 1.0, dtype=jnp.float32) * 0.5
    b_small = jnp.arange(C, dtype=jnp.float32) * 0.1

    # 1) channels_first: NCHW -> transpose-free sublane-reduction kernel.
    x_cf = jax.random.normal(k1, (2, C, 16, 16), dtype=jnp.float32)
    ln_cf = LayerNormPallas(C, eps=1e-6, data_format="channels_first")
    ln_cf.weight, ln_cf.bias = w_small, b_small
    y_cf = jax.block_until_ready(ln_cf(x_cf))
    y_cf_ref = _ref_channels_first(x_cf, w_small, b_small, ln_cf.eps)

    # 2) channels_last, small C, rows divisible by k -> lane-dense packed kernel.
    x_cl = jax.random.normal(k2, (2, 16, 16, C), dtype=jnp.float32)
    ln_cl = LayerNormPallas(C, eps=1e-6, data_format="channels_last")
    ln_cl.weight, ln_cl.bias = w_small, b_small
    y_cl = jax.block_until_ready(ln_cl(x_cl))
    y_cl_ref = _ref_channels_last(x_cl, w_small, b_small, ln_cl.eps)

    # 3) channels_last, wide C (multiple of 128) -> plain row kernel.
    C2 = 128
    x_cw = jax.random.normal(k3, (4, 8, C2), dtype=jnp.float32)
    ln_cw = LayerNormPallas(C2, eps=1e-6, data_format="channels_last")
    ln_cw.weight = jnp.linspace(0.5, 1.5, C2, dtype=jnp.float32)
    ln_cw.bias = jnp.linspace(-0.1, 0.1, C2, dtype=jnp.float32)
    y_cw = jax.block_until_ready(ln_cw(x_cw))
    y_cw_ref = _ref_channels_last(x_cw, ln_cw.weight, ln_cw.bias, ln_cw.eps)

    # 4) channels_last, small C, rows NOT divisible by k -> packed prefix + tail.
    x_cr = jax.random.normal(k4, (1, 5, 16, C), dtype=jnp.float32)   # rows = 80
    ln_cr = LayerNormPallas(C, eps=1e-6, data_format="channels_last")
    ln_cr.weight, ln_cr.bias = w_small, b_small
    y_cr = jax.block_until_ready(ln_cr(x_cr))
    y_cr_ref = _ref_channels_last(x_cr, w_small, b_small, ln_cr.eps)

    # 5) channels_last, small C, bf16 -> packed kernel with single-pass bf16 dots.
    x_cb = jax.random.normal(k5, (2, 16, 16, C), dtype=jnp.float32).astype(jnp.bfloat16)
    ln_cb = LayerNormPallas(C, eps=1e-6, data_format="channels_last")
    ln_cb.weight, ln_cb.bias = w_small, b_small
    y_cb = jax.block_until_ready(ln_cb(x_cb))
    y_cb_ref = _ref_channels_last(x_cb, w_small, b_small, ln_cb.eps)

    assert y_cf.shape == x_cf.shape and y_cf.dtype == x_cf.dtype
    assert y_cl.shape == x_cl.shape and y_cl.dtype == x_cl.dtype
    assert y_cw.shape == x_cw.shape and y_cw.dtype == x_cw.dtype
    assert y_cr.shape == x_cr.shape and y_cr.dtype == x_cr.dtype
    assert y_cb.shape == x_cb.shape and y_cb.dtype == x_cb.dtype
    assert jnp.allclose(y_cf, y_cf_ref, atol=1e-4, rtol=1e-4)
    assert jnp.allclose(y_cl, y_cl_ref, atol=1e-4, rtol=1e-4)
    assert jnp.allclose(y_cw, y_cw_ref, atol=1e-4, rtol=1e-4)
    assert jnp.allclose(y_cr, y_cr_ref, atol=1e-4, rtol=1e-4)
    assert jnp.allclose(y_cb.astype(jnp.float32), y_cb_ref, atol=1e-1, rtol=5e-2)

    print("KERNEL_OK")
</pallas_src>

<mosaic_0001>
module attributes {stable_mosaic.version = 11 : i64} {
  func.func @_ln_channels_first_kernel(%arg0: i32, %arg1: i32, %arg2: memref<1x4x256xf32, #tpu.memory_space<vmem>>, %arg3: memref<1x4x1xf32, #tpu.memory_space<vmem>>, %arg4: memref<1x4x1xf32, #tpu.memory_space<vmem>>, %arg5: memref<1x4x256xf32, #tpu.memory_space<vmem>>) attributes {dimension_semantics = [#tpu.dimension_semantics<parallel>, #tpu.dimension_semantics<parallel>], iteration_bounds = array<i64: 2, 1>, scalar_prefetch = 0 : i64, scratch_operands = 0 : i64, tpu.core_type = #tpu.core_type<tc>, window_params = [{transform_indices = @transform_0, window_bounds = array<i64: 1, 4, 256>}, {pipeline_mode = #tpu.pipeline_mode<synchronous>, transform_indices = @transform_1, window_bounds = array<i64: 1, 4, 1>}, {pipeline_mode = #tpu.pipeline_mode<synchronous>, transform_indices = @transform_2, window_bounds = array<i64: 1, 4, 1>}, {transform_indices = @transform_3, window_bounds = array<i64: 1, 4, 256>}]} {
    %c0 = arith.constant 0 : index
    %c0_0 = arith.constant 0 : index
    %c0_1 = arith.constant 0 : index
    %0 = vector.load %arg2[%c0, %c0_0, %c0_1] : memref<1x4x256xf32, #tpu.memory_space<vmem>>, vector<1x4x256xf32>
    %1 = vector.shape_cast %0 : vector<1x4x256xf32> to vector<4x256xf32>
    %cst = arith.constant dense<0.000000e+00> : vector<256xf32>
    %2 = vector.multi_reduction <add>, %1, %cst [0] : vector<4x256xf32> to vector<256xf32>
    %3 = vector.shape_cast %2 : vector<256xf32> to vector<1x256xf32>
    %cst_2 = arith.constant 2.500000e-01 : f32
    %4 = vector.broadcast %cst_2 : f32 to vector<1x256xf32>
    %5 = arith.mulf %3, %4 : vector<1x256xf32>
    %6 = arith.mulf %1, %1 : vector<4x256xf32>
    %cst_3 = arith.constant dense<0.000000e+00> : vector<256xf32>
    %7 = vector.multi_reduction <add>, %6, %cst_3 [0] : vector<4x256xf32> to vector<256xf32>
    %8 = vector.shape_cast %7 : vector<256xf32> to vector<1x256xf32>
    %cst_4 = arith.constant 2.500000e-01 : f32
    %9 = vector.broadcast %cst_4 : f32 to vector<1x256xf32>
    %10 = arith.mulf %8, %9 : vector<1x256xf32>
    %11 = arith.mulf %5, %5 : vector<1x256xf32>
    %12 = arith.subf %10, %11 : vector<1x256xf32>
    %cst_5 = arith.constant 0.000000e+00 : f32
    %13 = vector.broadcast %cst_5 : f32 to vector<1x256xf32>
    %14 = arith.maximumf %12, %13 : vector<1x256xf32>
    %cst_6 = arith.constant 9.99999997E-7 : f32
    %15 = vector.broadcast %cst_6 : f32 to vector<1x256xf32>
    %16 = arith.addf %14, %15 : vector<1x256xf32>
    %17 = math.rsqrt %16 : vector<1x256xf32>
    %c0_7 = arith.constant 0 : index
    %c0_8 = arith.constant 0 : index
    %c0_9 = arith.constant 0 : index
    %18 = vector.load %arg3[%c0_7, %c0_8, %c0_9] : memref<1x4x1xf32, #tpu.memory_space<vmem>>, vector<1x4x1xf32>
    %19 = vector.shape_cast %18 : vector<1x4x1xf32> to vector<4x1xf32>
    %c0_10 = arith.constant 0 : index
    %c0_11 = arith.constant 0 : index
    %c0_12 = arith.constant 0 : index
    %20 = vector.load %arg4[%c0_10, %c0_11, %c0_12] : memref<1x4x1xf32, #tpu.memory_space<vmem>>, vector<1x4x1xf32>
    %21 = vector.shape_cast %20 : vector<1x4x1xf32> to vector<4x1xf32>
    %22 = vector.broadcast %5 : vector<1x256xf32> to vector<4x256xf32>
    %23 = arith.subf %1, %22 : vector<4x256xf32>
    %24 = vector.broadcast %17 : vector<1x256xf32> to vector<4x256xf32>
    %25 = arith.mulf %23, %24 : vector<4x256xf32>
    %26 = vector.broadcast %19 : vector<4x1xf32> to vector<4x256xf32>
    %27 = arith.mulf %25, %26 : vector<4x256xf32>
    %28 = vector.broadcast %21 : vector<4x1xf32> to vector<4x256xf32>
    %29 = arith.addf %27, %28 : vector<4x256xf32>
    %c0_13 = arith.constant 0 : index
    %c0_14 = arith.constant 0 : index
    %c0_15 = arith.constant 0 : index
    %30 = vector.load %arg5[%c0_13, %c0_14, %c0_15] : memref<1x4x256xf32, #tpu.memory_space<vmem>>, vector<1x4x256xf32>
    %31 = vector.shape_cast %30 : vector<1x4x256xf32> to vector<4x256xf32>
    %32 = vector.shape_cast %29 : vector<4x256xf32> to vector<1x4x256xf32>
    tpu.vector_store %arg5[%c0_13, %c0_14, %c0_15], %32 {strides = array<i32>} : memref<1x4x256xf32, #tpu.memory_space<vmem>>, vector<1x4x256xf32>,
    return
  }
  func.func @transform_0(%arg0: i32, %arg1: i32) -> (i32, i32, i32) {
    %c0_i32 = arith.constant 0 : i32
    %c0_i32_0 = arith.constant 0 : i32
    return %arg0, %c0_i32, %arg1 : i32, i32, i32
  }
  func.func @transform_1(%arg0: i32, %arg1: i32) -> (i32, i32, i32) {
    %c0_i32 = arith.constant 0 : i32
    %c0_i32_0 = arith.constant 0 : i32
    %c0_i32_1 = arith.constant 0 : i32
    %c0_i32_2 = arith.constant 0 : i32
    return %c0_i32, %c0_i32_0, %c0_i32_1 : i32, i32, i32
  }
  func.func @transform_2(%arg0: i32, %arg1: i32) -> (i32, i32, i32) {
    %c0_i32 = arith.constant 0 : i32
    %c0_i32_0 = arith.constant 0 : i32
    %c0_i32_1 = arith.constant 0 : i32
    %c0_i32_2 = arith.constant 0 : i32
    return %c0_i32, %c0_i32_0, %c0_i32_1 : i32, i32, i32
  }
  func.func @transform_3(%arg0: i32, %arg1: i32) -> (i32, i32, i32) {
    %c0_i32 = arith.constant 0 : i32
    %c0_i32_0 = arith.constant 0 : i32
    return %arg0, %c0_i32, %arg1 : i32, i32, i32
  }
}

</mosaic_0001>

<llo_original>
// kernel: tpu_custom_call.1
$region0: #{tpu_custom_call.1}
  #allocation0 [shape = 'u32[]', space=smem, size = 0x4, offset = 0x4, fixed_abs, tag = 'smem constant byte address 0x4 - core index']
  #allocation1 [shape = 'u32[144,128]{1,0:T(1,128)}', space=vmem, size = 0x12000, scoped, tag = 'internal scratch']
  %s0 = inlined_call_operand.hbm [shape: f32[2,4,256], index: 0, kind: input, shape index: {}]
  %s1 = inlined_call_operand.vmem [shape: f32[1,4,1], index: 1, kind: input, shape index: {}]
  %s2 = inlined_call_operand.vmem [shape: f32[1,4,1], index: 2, kind: input, shape index: {}]
  %s3 = inlined_call_operand.hbm [shape: f32[2,4,256], index: 3, kind: output, shape index: {}]
  %s4 = sld [smem:[#allocation0]]
  $region49: #{tpu_custom_call.1} parent=0
    _
  %s6 = ssub.s32 1, %s4
  %s7 = scalar_select 0, %s6, %s4
  $region1: #{tpu_custom_call.1} parent=0
    #allocation2 [shape = 'u8[8192]{0}', space=vmem, size = 0x2000, scoped, tag = 'input window, operand 0']
    #allocation3 [shape = 's32[2]{0}', space=sflag, size = 0x8, scoped, tag = 'scoped memory for tpu_custom_call.1']
    #allocation4 [shape = 's32[2]{0}', space=sflag, size = 0x8, scoped, tag = 'scoped memory for tpu_custom_call.1']
    #allocation5 [shape = 'u8[8192]{0}', space=vmem, size = 0x2000, scoped, tag = 'output window, operand 0']
    %8 = vsyncpa [#allocation3], 0
    %s9 = scalar_lea.sflag [#allocation3], 1
    %10 = vsyncpa %s9, 0
    %11 = vsyncpa [#allocation4], 0
    %s12 = scalar_lea.sflag [#allocation4], 1
    %13 = vsyncpa %s12, 0
    loop: start=0, step=1, limit=4
    $region2: #{tpu_custom_call.1} parent=1 // loop_pre_header
      _
    $region3: #{tpu_custom_call.1} parent=1 // loop_header
      %s15 = sphi 0, %s19
      %p16 = scmp.ge.s32.totalorder %s15, 4
      %s22 = sphi 0, %s34
      %s23 = sphi 0, %s30
      %s24 = sphi 0, %s22
      %s25 = sphi 0, %s23
      %s26 = sphi 0, %s24
      %s27 = sphi 0, %s25
      %s39 = sphi 0, %s41
      %s42 = sphi 0, %s39
      %s43 = sphi 0, %s42
      %s59 = sphi 0, %s43
      %s63 = sphi 0, %s63
      %s65 = sphi 0, %s63
      %s66 = sphi 0, %s65
      %s80 = sphi 0, %s66
      %s84 = sphi 0, %s84
      %s86 = sphi 0, %s84
      %s87 = sphi 0, %s86
      %s101 = sphi 0, %s87
      %s109 = sphi 0, %s111
      %s112 = sphi 0, %s109
      %s113 = sphi 0, %s112
      %s129 = sphi 0, %s113
    $region4: #{tpu_custom_call.1} parent=1 // loop_header_branch
      %18 = sbr.rel (%p16) target = $region8
    $region5: #{tpu_custom_call.1} parent=1 // loop_body
      %s20 = ssub.s32 %s15, 1
      %s21 = ssub.s32 %s15, 2
      %s28 = sadd.s32 1, %s23
      %p29 = scmp.ge.s32.totalorder %s28, 1
      %s30 = scalar_select %p29, 0, %s28
      %s31 = sadd.s32 1, %s22
      %s32 = scalar_select %p29, %s31, %s22
      %p33 = scmp.ge.s32.totalorder %s32, 2
      %s34 = scalar_select %p33, 0, %s32
      %s35 = ssub.s32 %s22, %s34
      %s36 = ssub.s32 %s23, %s30
      %s37 = sor.u32 %s35, %s36
      %p38 = scmp.eq.s32.totalorder %s37, 0
      %s40 = sadd.s32 %s39, 1
      %s41 = scalar_select %p38, %s39, %s40
      %p44 = pneg %p38
      %p45 = scmp.eq.s32.totalorder %s15, 1
      %p46 = por %p44, %p45
      %p47 = scmp.ne.s32.totalorder %s39, %s42
      %p48 = scmp.eq.s32.totalorder %s15, 0
      %p49 = por %p47, %p48
      %p50 = scmp.ne.s32.totalorder %s39, %s42
      %p51 = scmp.eq.s32.totalorder %s20, 1
      %p52 = por %p50, %p51
      %p53 = scmp.ne.s32.totalorder %s42, %s43
      %p54 = scmp.eq.s32.totalorder %s20, 0
      %p55 = por %p53, %p54
      %p56 = scmp.ne.s32.totalorder %s42, %s43
      %p57 = scmp.eq.s32.totalorder %s21, 1
      %p58 = por %p56, %p57
      %p60 = scmp.ne.s32.totalorder %s43, %s59
      %p61 = scmp.eq.s32.totalorder %s21, 0
      %p62 = por %p60, %p61
      %s64 = sadd.s32 %s63, 1
      %p67 = scmp.eq.s32.totalorder %s15, 1
      %p68 = scmp.ne.s32.totalorder %s63, %s65
      %p69 = scmp.eq.s32.totalorder %s15, 0
      %p70 = por %p68, %p69
      %p71 = scmp.ne.s32.totalorder %s63, %s65
      %p72 = scmp.eq.s32.totalorder %s20, 1
      %p73 = por %p71, %p72
      %p74 = scmp.ne.s32.totalorder %s65, %s66
      %p75 = scmp.eq.s32.totalorder %s20, 0
      %p76 = por %p74, %p75
      %p77 = scmp.ne.s32.totalorder %s65, %s66
      %p78 = scmp.eq.s32.totalorder %s21, 1
      %p79 = por %p77, %p78
      %p81 = scmp.ne.s32.totalorder %s66, %s80
      %p82 = scmp.eq.s32.totalorder %s21, 0
      %p83 = por %p81, %p82
      %s85 = sadd.s32 %s84, 1
      %p88 = scmp.eq.s32.totalorder %s15, 1
      %p89 = scmp.ne.s32.totalorder %s84, %s86
      %p90 = scmp.eq.s32.totalorder %s15, 0
      %p91 = por %p89, %p90
      %p92 = scmp.ne.s32.totalorder %s84, %s86
      %p93 = scmp.eq.s32.totalorder %s20, 1
      %p94 = por %p92, %p93
      %p95 = scmp.ne.s32.totalorder %s86, %s87
      %p96 = scmp.eq.s32.totalorder %s20, 0
      %p97 = por %p95, %p96
      %p98 = scmp.ne.s32.totalorder %s86, %s87
      %p99 = scmp.eq.s32.totalorder %s21, 1
      %p100 = por %p98, %p99
      %p102 = scmp.ne.s32.totalorder %s87, %s101
      %p103 = scmp.eq.s32.totalorder %s21, 0
      %p104 = por %p102, %p103
      %s105 = ssub.s32 %s22, %s34
      %s106 = ssub.s32 %s23, %s30
      %s107 = sor.u32 %s105, %s106
      %p108 = scmp.eq.s32.totalorder %s107, 0
      %s110 = sadd.s32 %s109, 1
      %s111 = scalar_select %p108, %s109, %s110
      %p114 = pneg %p108
      %p115 = scmp.eq.s32.totalorder %s15, 1
      %p116 = por %p114, %p115
      %p117 = scmp.ne.s32.totalorder %s109, %s112
      %p118 = scmp.eq.s32.totalorder %s15, 0
      %p119 = por %p117, %p118
      %p120 = scmp.ne.s32.totalorder %s109, %s112
      %p121 = scmp.eq.s32.totalorder %s20, 1
      %p122 = por %p120, %p121
      %p123 = scmp.ne.s32.totalorder %s112, %s113
      %p124 = scmp.eq.s32.totalorder %s20, 0
      %p125 = por %p123, %p124
      %p126 = scmp.ne.s32.totalorder %s112, %s113
      %p127 = scmp.eq.s32.totalorder %s21, 1
      %p128 = por %p126, %p127
      %p130 = scmp.ne.s32.totalorder %s113, %s129
      %p131 = scmp.eq.s32.totalorder %s21, 0
      %p132 = por %p130, %p131
      %p133 = scmp.le.s32.totalorder 1, %s15
      %p134 = scmp.lt.s32.totalorder %s15, 3
      %p135 = pnand %p133, %p134
      %p136 = pneg %p135
      // Predicated region
      $region9: #{tpu_custom_call.1} parent=5 // pred_check
        _
      $region10: #{tpu_custom_call.1} parent=5 // pred_check_branch
        %138 = sbr.rel (%p135) target = $region12
      $region11: #{tpu_custom_call.1} parent=5 // pred_region
        %s139 = ssub.s32 %s15, 1
        // Predicated region
        $region13: #{tpu_custom_call.1} parent=11 // pred_check
          %p140 = pneg %p76
        $region14: #{tpu_custom_call.1} parent=11 // pred_check_branch
          %142 = sbr.rel (%p140) target = $region16
        $region15: #{tpu_custom_call.1} parent=11 // pred_region
          _
        $region16: #{tpu_custom_call.1} parent=11 // pred_fallthru
          _
        // Predicated region
        $region17: #{tpu_custom_call.1} parent=11 // pred_check
          %p143 = pneg %p97
        $region18: #{tpu_custom_call.1} parent=11 // pred_check_branch
          %145 = sbr.rel (%p143) target = $region20
        $region19: #{tpu_custom_call.1} parent=11 // pred_region
          _
        $region20: #{tpu_custom_call.1} parent=11 // pred_fallthru
          _
      $region12: #{tpu_custom_call.1} parent=5 // pred_fallthru
        _
      %p146 = scmp.lt.s32.totalorder %s15, 2
      // Predicated region
      $region21: #{tpu_custom_call.1} parent=5 // pred_check
        %p147 = pneg %p146
      $region22: #{tpu_custom_call.1} parent=5 // pred_check_branch
        %149 = sbr.rel (%p147) target = $region24
      $region23: #{tpu_custom_call.1} parent=5 // pred_region
        // Predicated region
        $region25: #{tpu_custom_call.1} parent=23 // pred_check
          %p150 = pneg %p49
        $region26: #{tpu_custom_call.1} parent=23 // pred_check_branch
          %152 = sbr.rel (%p150) target = $region28
        $region27: #{tpu_custom_call.1} parent=23 // pred_region
          %s153 = sand.u32 %s39, 1
          %s154 = scalar_lea.sflag [#allocation3], %s153
          %s155 = sand.u32 %s39, 1
          %s156 = smul.addr %s155, 8
          %s157 = scalar_lea.vmem [#allocation2], %s156
          %s158 = smul.u32 2, %s23
          %s160 = ssub.s32 128, 128
          %161 = vsyncadd %s154, %s160
          %s162 = smul.addr %s22, 2
          %s163 = sadd.s32 %s158, %s162
          %s164 = smul.addr %s163, 64
          %s165 = scalar_lea.hbm %s0, %s164
          %s167 = sshll.u32 %s157, 4
          %s168 = int_to_ptr.vmem [resolvable:$true] %s167
          %170 = dma.hbm_to_vmem [thread:$0]  %s165, 128, %s168, %s154
        $region28: #{tpu_custom_call.1} parent=23 // pred_fallthru
          _
      $region24: #{tpu_custom_call.1} parent=5 // pred_fallthru
        _
      %p171 = scmp.le.s32.totalorder 1, %s15
      %p172 = scmp.lt.s32.totalorder %s15, 3
      %p173 = pnand %p171, %p172
      %p174 = pneg %p173
      // Predicated region
      $region29: #{tpu_custom_call.1} parent=5 // pred_check
        _
      $region30: #{tpu_custom_call.1} parent=5 // pred_check_branch
        %176 = sbr.rel (%p173) target = $region32
      $region31: #{tpu_custom_call.1} parent=5 // pred_region
        %s177 = ssub.s32 %s15, 1
        %s178 = sand.u32 %s42, 1
        %s179 = scalar_lea.sflag [#allocation3], %s178
        %s180 = sand.u32 %s42, 1
        %s181 = smul.addr %s180, 8
        %s182 = scalar_lea.vmem [#allocation2], %s181
        // Predicated region
        $region33: #{tpu_custom_call.1} parent=31 // pred_check
          %p183 = pneg %p55
        $region34: #{tpu_custom_call.1} parent=31 // pred_check_branch
          %185 = sbr.rel (%p183) target = $region36
        $region35: #{tpu_custom_call.1} parent=31 // pred_region
          %186 = dma.done %s179, 128
        $region36: #{tpu_custom_call.1} parent=31 // pred_fallthru
          _
        %s187 = sand.u32 %s42, 1
        %s188 = scalar_lea.sflag [#allocation3], %s187
        %s189 = sand.u32 %s42, 1
        %s190 = smul.addr %s189, 8
        %s191 = scalar_lea.vmem [#allocation2], %s190
        %p192 = pneg %p55
        %p193 = pneg %p52
        %p194 = pneg %p76
        %p195 = pneg %p73
        %p196 = pneg %p97
        %p197 = pneg %p94
        %p198 = pneg %p125
        %p199 = pneg %p122
        %s200 = sand.u32 %s112, 1
        %s201 = scalar_lea.sflag [#allocation4], %s200
        %s202 = sand.u32 %s112, 1
        %s203 = smul.addr %s202, 8
        %s204 = scalar_lea.vmem [#allocation5], %s203
        %s205 = smul.u32 2, %s25
        %s206 = smul.u32 2, %s25
        %v207 = vld [vmem:[%s182] sm:$0xff]
        %v209 = vcombine.high %v207, %v207
        %vm211 = vcmask 1043456
        %v212 = vsel %vm211, %v207, 0.0
        %v213 = vrot.slane %v212, 4
        %v214 = vadd.f32 %v212, %v213
        %v215 = vrot.slane %v214, 2
        %v216 = vadd.f32 %v214, %v215
        %v217 = vrot.slane %v216, 1
        %v218 = vadd.f32 %v216, %v217
        %v219 = vsel %vm211, %v209, 0.0
        %v220 = vrot.slane %v219, 4
        %v221 = vadd.f32 %v219, %v220
        %v222 = vrot.slane %v221, 2
        %v223 = vadd.f32 %v221, %v222
        %v224 = vrot.slane %v223, 1
        %v225 = vadd.f32 %v223, %v224
        %v226 = vmul.f32 %v218, 0.25
        %v227 = vmul.f32 %v225, 0.25
        %v228 = vmul.f32 %v207, %v207
        %v230 = vcombine.high %v228, %v228
        %v232 = vsel %vm211, %v228, 0.0
        %v233 = vrot.slane %v232, 4
        %v234 = vadd.f32 %v232, %v233
        %v235 = vrot.slane %v234, 2
        %v236 = vadd.f32 %v234, %v235
        %v237 = vrot.slane %v236, 1
        %v238 = vadd.f32 %v236, %v237
        %v239 = vsel %vm211, %v230, 0.0
        %v240 = vrot.slane %v239, 4
        %v241 = vadd.f32 %v239, %v240
        %v242 = vrot.slane %v241, 2
        %v243 = vadd.f32 %v241, %v242
        %v244 = vrot.slane %v243, 1
        %v245 = vadd.f32 %v243, %v244
        %v246 = vmul.f32 %v238, 0.25
        %v247 = vmul.f32 %v245, 0.25
        %v248 = vmul.f32 %v226, %v226
        %v249 = vmul.f32 %v227, %v227
        %v250 = vsub.f32 %v246, %v248
        %v251 = vsub.f32 %v247, %v249
        %v252 = vmax.f32 %v250, 0.0
        %v253 = vmax.f32 %v251, 0.0
        %v254 = vadd.f32 %v252, 1e-06
        %v255 = vadd.f32 %v253, 1e-06
        %v256 = vrsqrt.pop %v254
        %v257 = vrsqrt.pop %v255
        %v258 = vld [vmem:[%s1] sm:$0xf]
        %v259 = vld [vmem:[%s2] sm:$0xf]
        %v262 = vcombine.low %v226, %v227
        %v264 = vsub.f32 %v207, %v262
        %v267 = vcombine.low %v256, %v257
        %v269 = vmul.f32 %v264, %v267
        %271 = vset.pattern.permute.xlu0 0
        %272 = vperm.xlu0 %271, %v258
        %v273 = vpop.permute.xlu0 %272
        %v275 = vunpack.c.l.s4 839922192
        %v276 = vunpack.c.0.s8 %v275
        %v277 = vlaneseq
        %v278 = vshrl.u32 %v277, 7
        %v279 = vsub.s32 %v276, %v278
        %v280 = vrot.slane %v273, %v279
        %v282 = vmul.f32 %v269, %v280
        %284 = vset.pattern.permute.xlu0 0
        %285 = vperm.xlu0 %284, %v259
        %v286 = vpop.permute.xlu0 %285
        %v288 = vunpack.c.l.s4 839922192
        %v289 = vunpack.c.0.s8 %v288
        %v290 = vlaneseq
        %v291 = vshrl.u32 %v290, 7
        %v292 = vsub.s32 %v289, %v291
        %v293 = vrot.slane %v286, %v292
        %v295 = vadd.f32 %v282, %v293
        %296 = vst [vmem:[%s204] sm:$0xff] %v295
        %s297 = sand.u32 %s112, 1
        %s298 = scalar_lea.sflag [#allocation4], %s297
        %s299 = sand.u32 %s112, 1
        %s300 = smul.addr %s299, 8
        %s301 = scalar_lea.vmem [#allocation5], %s300
        // Predicated region
        $region37: #{tpu_custom_call.1} parent=31 // pred_check
          %p302 = pneg %p122
        $region38: #{tpu_custom_call.1} parent=31 // pred_check_branch
          %304 = sbr.rel (%p302) target = $region40
        $region39: #{tpu_custom_call.1} parent=31 // pred_region
          %s305 = smul.u32 2, %s25
          %s307 = ssub.s32 128, 128
          %308 = vsyncadd %s298, %s307
          %s309 = smul.addr %s24, 2
          %s310 = sadd.s32 %s305, %s309
          %s311 = smul.addr %s310, 64
          %s312 = scalar_lea.hbm %s3, %s311
          %s314 = sshll.u32 %s301, 4
          %s315 = int_to_ptr.vmem [resolvable:$true] %s314
          %317 = dma.vmem_to_hbm [thread:$0]  %s315, 128, %s312, %s298
        $region40: #{tpu_custom_call.1} parent=31 // pred_fallthru
          _
      $region32: #{tpu_custom_call.1} parent=5 // pred_fallthru
        _
      %p318 = scmp.le.s32.totalorder 2, %s15
      // Predicated region
      $region41: #{tpu_custom_call.1} parent=5 // pred_check
        %p319 = pneg %p318
      $region42: #{tpu_custom_call.1} parent=5 // pred_check_branch
        %321 = sbr.rel (%p319) target = $region44
      $region43: #{tpu_custom_call.1} parent=5 // pred_region
        %s322 = ssub.s32 %s15, 2
        // Predicated region
        $region45: #{tpu_custom_call.1} parent=43 // pred_check
          %p323 = pneg %p128
        $region46: #{tpu_custom_call.1} parent=43 // pred_check_branch
          %325 = sbr.rel (%p323) target = $region48
        $region47: #{tpu_custom_call.1} parent=43 // pred_region
          %s326 = sand.u32 %s113, 1
          %s327 = scalar_lea.sflag [#allocation4], %s326
          %s328 = sand.u32 %s113, 1
          %s329 = smul.addr %s328, 8
          %s330 = scalar_lea.vmem [#allocation5], %s329
          %331 = dma.done %s327, 128
        $region48: #{tpu_custom_call.1} parent=43 // pred_fallthru
          _
      $region44: #{tpu_custom_call.1} parent=5 // pred_fallthru
        _
    $region6: #{tpu_custom_call.1} parent=1 // loop_footer
      %s19 = sadd.s32 1, %s15
    $region7: #{tpu_custom_call.1} parent=1 // loop_footer_branch
      %14 = sbr.rel target = $region3
    $region8: #{tpu_custom_call.1} parent=1 // loop_exit
      _
    %332 = vsyncpa [#allocation3], 1
    %s333 = scalar_lea.sflag [#allocation3], 1
    %334 = vsyncpa %s333, 1
    %335 = vsyncpa [#allocation4], 1
    %s336 = scalar_lea.sflag [#allocation4], 1
    %337 = vsyncpa %s336, 1

</llo_original>
